<compile_context>
chip_gen: v5e
topology: v5e:2x2
jax: 0.10.0
libtpu: 0.0.40
codegen_flags: <defaults>
</compile_context>

<pallas_src>
import functools

import jax
import jax.numpy as jnp
from jax import lax
from jax.experimental import pallas as pl
from jax.experimental.pallas import tpu as pltpu


def _sumpool_kernel(x_ref, o_ref, xp_ref, *, k, stride, pad, Ho, Wo):
    # x_ref : (H,  W,  Cb)  unpadded input planes (channels-last, planes on lanes)
    # o_ref : (Ho, Wo, Cb)  sum-pooled output planes
    # xp_ref: (Hp, Wp, Cb)  f32 VMEM scratch for the zero-padded plane
    H, W, _ = x_ref.shape
    Hp, Wp, _ = xp_ref.shape

    if pad > 0:
        # Build the zero halo in VMEM -- no extra HBM pass for padding.
        xp_ref[...] = jnp.zeros_like(xp_ref)
        xp_ref[pad:pad + H, pad:pad + W, :] = x_ref[...].astype(jnp.float32)
        src = xp_ref
    else:
        src = x_ref

    # Separable sliding-window sum at unit stride: 2k shifted adds, not k^2.
    Hf = Hp - k + 1  # rows of the stride-1 result (== Ho when stride == 1)
    Wf = Wp - k + 1  # cols of the stride-1 result (== Wo when stride == 1)

    # H-axis partial sums: shifts along the major axis (never touch lanes).
    tmp = src[0:Hf, :, :].astype(jnp.float32)
    for di in range(1, k):
        tmp = tmp + src[di:di + Hf, :, :].astype(jnp.float32)

    # W-axis partial sums: shifts along the sublane axis (never touch lanes).
    out = tmp[:, 0:Wf, :]
    for dj in range(1, k):
        out = out + tmp[:, dj:dj + Wf, :]

    if stride > 1:
        # Static strided subsample of the stride-1 result (not exercised by the
        # demo; keeps strided access off the lane dim).
        out = out[0:(Ho - 1) * stride + 1:stride,
                  0:(Wo - 1) * stride + 1:stride, :]

    o_ref[...] = out.astype(o_ref.dtype)


def sum_pool2d(x, kernel_size: int, stride: int = 1, padding: int = 0):
    """Equivalent of F.avg_pool2d(x, k, s, p) * k * k (count_include_pad=True)."""
    N, C, H, W = x.shape
    k, s, p = kernel_size, stride, padding
    Hp, Wp = H + 2 * p, W + 2 * p
    Ho = (Hp - k) // s + 1
    Wo = (Wp - k) // s + 1

    NC = N * C
    # Channels-last: planes on the lane (last) dim so window shifts avoid lanes.
    xcl = jnp.transpose(x.reshape(NC, H, W), (1, 2, 0))  # (H, W, NC)

    # Lane-pad the plane count to a multiple of 128 only when it is already
    # >= 128 (dense lanes, divisible blocks); small NC uses a full-dim block.
    if NC >= 128 and NC % 128 != 0:
        NCp = ((NC + 127) // 128) * 128
        xcl = jnp.pad(xcl, ((0, 0), (0, 0), (0, NCp - NC)))
    else:
        NCp = NC

    # Planes per grid step (lane-dim block): a multiple of 128 or the full dim,
    # sized to keep double-buffered blocks + scratch within a VMEM budget.
    def _step_bytes(cb):
        return (2 * (H * W + Ho * Wo) * x.dtype.itemsize + Hp * Wp * 4) * cb

    if NCp % 128 == 0:
        Cb = 128
        while (Cb < min(NCp, 512) and NCp % (Cb * 2) == 0
               and _step_bytes(Cb * 2) <= 24 * 1024 * 1024):
            Cb *= 2
    else:
        Cb = NCp
    grid = (NCp // Cb,)

    vmem_limit = int(min(32 * 1024 * 1024,
                         max(16 * 1024 * 1024, _step_bytes(Cb) + (1 << 20))))

    kernel = functools.partial(_sumpool_kernel, k=k, stride=s, pad=p, Ho=Ho, Wo=Wo)

    out_cl = pl.pallas_call(
        kernel,
        out_shape=jax.ShapeDtypeStruct((Ho, Wo, NCp), x.dtype),
        grid_spec=pltpu.PrefetchScalarGridSpec(
            num_scalar_prefetch=0,
            grid=grid,
            in_specs=[pl.BlockSpec((H, W, Cb), lambda c: (0, 0, c))],
            out_specs=pl.BlockSpec((Ho, Wo, Cb), lambda c: (0, 0, c)),
            scratch_shapes=[pltpu.VMEM((Hp, Wp, Cb), jnp.float32)],
        ),
        compiler_params=pltpu.CompilerParams(
            dimension_semantics=("parallel",),
            vmem_limit_bytes=vmem_limit,
        ),
    )(xcl)

    out_cl = out_cl[:, :, :NC]  # drop lane padding, if any
    return jnp.transpose(out_cl, (2, 0, 1)).reshape(N, C, Ho, Wo)


if __name__ == "__main__":
    # SumPool2d has no learnable parameters; only hyperparameters.
    kernel_size, stride, padding = 3, 1, 1

    key = jax.random.PRNGKey(0)
    x = jax.random.normal(key, (2, 4, 16, 16), dtype=jnp.float32)

    out = sum_pool2d(x, kernel_size, stride, padding)
    out = jax.block_until_ready(out)

    # Pure-JAX reference: sliding-window sum (== avg_pool2d * k*k, count_include_pad=True)
    ref = lax.reduce_window(
        x,
        0.0,
        lax.add,
        window_dimensions=(1, 1, kernel_size, kernel_size),
        window_strides=(1, 1, stride, stride),
        padding=((0, 0), (0, 0), (padding, padding), (padding, padding)),
    )

    assert out.shape == ref.shape, (out.shape, ref.shape)
    assert jnp.allclose(out, ref, atol=1e-5, rtol=1e-5)
    print("KERNEL_OK")
</pallas_src>

<mosaic_0001>
module attributes {stable_mosaic.version = 11 : i64} {
  func.func @_sumpool_kernel(%arg0: i32, %arg1: memref<16x16x8xf32, #tpu.memory_space<vmem>>, %arg2: memref<16x16x8xf32, #tpu.memory_space<vmem>>, %arg3: memref<18x18x8xf32, #tpu.memory_space<vmem>>) attributes {dimension_semantics = [#tpu.dimension_semantics<parallel>], iteration_bounds = array<i64: 1>, scalar_prefetch = 0 : i64, scratch_operands = 1 : i64, tpu.core_type = #tpu.core_type<tc>, window_params = [{transform_indices = @transform_0, window_bounds = array<i64: 16, 16, 8>}, {transform_indices = @transform_1, window_bounds = array<i64: 16, 16, 8>}]} {
    %cst = arith.constant 0.000000e+00 : f32
    %0 = vector.broadcast %cst : f32 to vector<18x18x8xf32>
    %c0 = arith.constant 0 : index
    %c0_0 = arith.constant 0 : index
    %c0_1 = arith.constant 0 : index
    %1 = vector.load %arg3[%c0, %c0_0, %c0_1] : memref<18x18x8xf32, #tpu.memory_space<vmem>>, vector<18x18x8xf32>
    tpu.vector_store %arg3[%c0, %c0_0, %c0_1], %0 {strides = array<i32>} : memref<18x18x8xf32, #tpu.memory_space<vmem>>, vector<18x18x8xf32>,
    %c0_2 = arith.constant 0 : index
    %c0_3 = arith.constant 0 : index
    %c0_4 = arith.constant 0 : index
    %2 = vector.load %arg1[%c0_2, %c0_3, %c0_4] : memref<16x16x8xf32, #tpu.memory_space<vmem>>, vector<16x16x8xf32>
    %c1 = arith.constant 1 : index
    %c1_5 = arith.constant 1 : index
    %c0_6 = arith.constant 0 : index
    %3 = vector.load %arg3[%c1, %c1_5, %c0_6] : memref<18x18x8xf32, #tpu.memory_space<vmem>>, vector<16x16x8xf32>
    tpu.vector_store %arg3[%c1, %c1_5, %c0_6], %2 {strides = array<i32>} : memref<18x18x8xf32, #tpu.memory_space<vmem>>, vector<16x16x8xf32>,
    %c0_7 = arith.constant 0 : index
    %c0_8 = arith.constant 0 : index
    %c0_9 = arith.constant 0 : index
    %4 = vector.load %arg3[%c0_7, %c0_8, %c0_9] : memref<18x18x8xf32, #tpu.memory_space<vmem>>, vector<16x18x8xf32>
    %c1_10 = arith.constant 1 : index
    %c0_11 = arith.constant 0 : index
    %c0_12 = arith.constant 0 : index
    %5 = vector.load %arg3[%c1_10, %c0_11, %c0_12] : memref<18x18x8xf32, #tpu.memory_space<vmem>>, vector<16x18x8xf32>
    %6 = arith.addf %4, %5 : vector<16x18x8xf32>
    %c2 = arith.constant 2 : index
    %c0_13 = arith.constant 0 : index
    %c0_14 = arith.constant 0 : index
    %7 = vector.load %arg3[%c2, %c0_13, %c0_14] : memref<18x18x8xf32, #tpu.memory_space<vmem>>, vector<16x18x8xf32>
    %8 = arith.addf %6, %7 : vector<16x18x8xf32>
    %9 = vector.extract_strided_slice %8 {offsets = [0, 0, 0], sizes = [16, 16, 8], strides = [1, 1, 1]} : vector<16x18x8xf32> to vector<16x16x8xf32>
    %10 = vector.extract_strided_slice %8 {offsets = [0, 1, 0], sizes = [16, 16, 8], strides = [1, 1, 1]} : vector<16x18x8xf32> to vector<16x16x8xf32>
    %11 = arith.addf %9, %10 : vector<16x16x8xf32>
    %12 = vector.extract_strided_slice %8 {offsets = [0, 2, 0], sizes = [16, 16, 8], strides = [1, 1, 1]} : vector<16x18x8xf32> to vector<16x16x8xf32>
    %13 = arith.addf %11, %12 : vector<16x16x8xf32>
    %c0_15 = arith.constant 0 : index
    %c0_16 = arith.constant 0 : index
    %c0_17 = arith.constant 0 : index
    %14 = vector.load %arg2[%c0_15, %c0_16, %c0_17] : memref<16x16x8xf32, #tpu.memory_space<vmem>>, vector<16x16x8xf32>
    tpu.vector_store %arg2[%c0_15, %c0_16, %c0_17], %13 {strides = array<i32>} : memref<16x16x8xf32, #tpu.memory_space<vmem>>, vector<16x16x8xf32>,
    return
  }
  func.func @transform_0(%arg0: i32) -> (i32, i32, i32) {
    %c0_i32 = arith.constant 0 : i32
    %c0_i32_0 = arith.constant 0 : i32
    %c0_i32_1 = arith.constant 0 : i32
    return %c0_i32, %c0_i32_0, %arg0 : i32, i32, i32
  }
  func.func @transform_1(%arg0: i32) -> (i32, i32, i32) {
    %c0_i32 = arith.constant 0 : i32
    %c0_i32_0 = arith.constant 0 : i32
    %c0_i32_1 = arith.constant 0 : i32
    return %c0_i32, %c0_i32_0, %arg0 : i32, i32, i32
  }
}

</mosaic_0001>

<llo_original>
// kernel: tpu_custom_call.1
$region0: #{tpu_custom_call.1}
  #allocation0 [shape = 'u32[]', space=smem, size = 0x4, offset = 0x4, fixed_abs, tag = 'smem constant byte address 0x4 - core index']
  #allocation1 [shape = 'u32[72,128]{1,0:T(1,128)}', space=vmem, size = 0x9000, scoped, tag = 'internal scratch']
  #allocation2 [shape = 'f32[18,18,8]{2,1,0:T(8,128)}', space=vmem, size = 0x36000, scoped, tag = 'scratch operand']
  %s0 = inlined_call_operand.vmem [shape: f32[16,16,8], index: 0, kind: input, shape index: {}]
  %s1 = inlined_call_operand.vmem [shape: f32[16,16,8], index: 1, kind: output, shape index: {}]
  %s2 = sld [smem:[#allocation0]]
  $region14: #{tpu_custom_call.1} parent=0
    _
  %s4 = ssub.s32 1, %s2
  %s5 = scalar_select 0, %s4, %s2
  // Predicated region
  $region2: #{tpu_custom_call.1} parent=0 // pred_check
    _
  $region3: #{tpu_custom_call.1} parent=0 // pred_check_branch
    %7 = sbr.rel (0) target = $region5
  $region4: #{tpu_custom_call.1} parent=0 // pred_region
    _
  $region5: #{tpu_custom_call.1} parent=0 // pred_fallthru
    _
  %vm8 = vcmask 64512
  %9 = vst.msk [vmem:[#allocation2] sm:$0xff] %vm8, 0.0
  %10 = vst.msk [vmem:[#allocation2 + $0x8] sm:$0xff] %vm8, 0.0
  %vm11 = vcmask 58368
  %12 = vst.msk [vmem:[#allocation2 + $0x10] sm:$0x3] %vm11, 0.0
  %13 = vst.msk [vmem:[#allocation2 + $0x18] sm:$0xff] %vm8, 0.0
  %14 = vst.msk [vmem:[#allocation2 + $0x20] sm:$0xff] %vm8, 0.0
  %15 = vst.msk [vmem:[#allocation2 + $0x28] sm:$0x3] %vm11, 0.0
  %16 = vst.msk [vmem:[#allocation2 + $0x30] sm:$0xff] %vm8, 0.0
  %17 = vst.msk [vmem:[#allocation2 + $0x38] sm:$0xff] %vm8, 0.0
  %18 = vst.msk [vmem:[#allocation2 + $0x40] sm:$0x3] %vm11, 0.0
  %19 = vst.msk [vmem:[#allocation2 + $0x48] sm:$0xff] %vm8, 0.0
  %20 = vst.msk [vmem:[#allocation2 + $0x50] sm:$0xff] %vm8, 0.0
  %21 = vst.msk [vmem:[#allocation2 + $0x58] sm:$0x3] %vm11, 0.0
  %22 = vst.msk [vmem:[#allocation2 + $0x60] sm:$0xff] %vm8, 0.0
  %23 = vst.msk [vmem:[#allocation2 + $0x68] sm:$0xff] %vm8, 0.0
  %24 = vst.msk [vmem:[#allocation2 + $0x70] sm:$0x3] %vm11, 0.0
  %25 = vst.msk [vmem:[#allocation2 + $0x78] sm:$0xff] %vm8, 0.0
  %26 = vst.msk [vmem:[#allocation2 + $0x80] sm:$0xff] %vm8, 0.0
  %27 = vst.msk [vmem:[#allocation2 + $0x88] sm:$0x3] %vm11, 0.0
  %28 = vst.msk [vmem:[#allocation2 + $0x90] sm:$0xff] %vm8, 0.0
  %29 = vst.msk [vmem:[#allocation2 + $0x98] sm:$0xff] %vm8, 0.0
  %30 = vst.msk [vmem:[#allocation2 + $0xa0] sm:$0x3] %vm11, 0.0
  %31 = vst.msk [vmem:[#allocation2 + $0xa8] sm:$0xff] %vm8, 0.0
  %32 = vst.msk [vmem:[#allocation2 + $0xb0] sm:$0xff] %vm8, 0.0
  %33 = vst.msk [vmem:[#allocation2 + $0xb8] sm:$0x3] %vm11, 0.0
  %34 = vst.msk [vmem:[#allocation2 + $0xc0] sm:$0xff] %vm8, 0.0
  %35 = vst.msk [vmem:[#allocation2 + $0xc8] sm:$0xff] %vm8, 0.0
  %36 = vst.msk [vmem:[#allocation2 + $0xd0] sm:$0x3] %vm11, 0.0
  %37 = vst.msk [vmem:[#allocation2 + $0xd8] sm:$0xff] %vm8, 0.0
  %38 = vst.msk [vmem:[#allocation2 + $0xe0] sm:$0xff] %vm8, 0.0
  %39 = vst.msk [vmem:[#allocation2 + $0xe8] sm:$0x3] %vm11, 0.0
  %40 = vst.msk [vmem:[#allocation2 + $0xf0] sm:$0xff] %vm8, 0.0
  %41 = vst.msk [vmem:[#allocation2 + $0xf8] sm:$0xff] %vm8, 0.0
  %42 = vst.msk [vmem:[#allocation2 + $0x100] sm:$0x3] %vm11, 0.0
  %43 = vst.msk [vmem:[#allocation2 + $0x108] sm:$0xff] %vm8, 0.0
  %44 = vst.msk [vmem:[#allocation2 + $0x110] sm:$0xff] %vm8, 0.0
  %45 = vst.msk [vmem:[#allocation2 + $0x118] sm:$0x3] %vm11, 0.0
  %46 = vst.msk [vmem:[#allocation2 + $0x120] sm:$0xff] %vm8, 0.0
  %47 = vst.msk [vmem:[#allocation2 + $0x128] sm:$0xff] %vm8, 0.0
  %48 = vst.msk [vmem:[#allocation2 + $0x130] sm:$0x3] %vm11, 0.0
  %49 = vst.msk [vmem:[#allocation2 + $0x138] sm:$0xff] %vm8, 0.0
  %50 = vst.msk [vmem:[#allocation2 + $0x140] sm:$0xff] %vm8, 0.0
  %51 = vst.msk [vmem:[#allocation2 + $0x148] sm:$0x3] %vm11, 0.0
  %52 = vst.msk [vmem:[#allocation2 + $0x150] sm:$0xff] %vm8, 0.0
  %53 = vst.msk [vmem:[#allocation2 + $0x158] sm:$0xff] %vm8, 0.0
  %54 = vst.msk [vmem:[#allocation2 + $0x160] sm:$0x3] %vm11, 0.0
  %55 = vst.msk [vmem:[#allocation2 + $0x168] sm:$0xff] %vm8, 0.0
  %56 = vst.msk [vmem:[#allocation2 + $0x170] sm:$0xff] %vm8, 0.0
  %57 = vst.msk [vmem:[#allocation2 + $0x178] sm:$0x3] %vm11, 0.0
  %58 = vst.msk [vmem:[#allocation2 + $0x180] sm:$0xff] %vm8, 0.0
  %59 = vst.msk [vmem:[#allocation2 + $0x188] sm:$0xff] %vm8, 0.0
  %60 = vst.msk [vmem:[#allocation2 + $0x190] sm:$0x3] %vm11, 0.0
  %61 = vst.msk [vmem:[#allocation2 + $0x198] sm:$0xff] %vm8, 0.0
  %62 = vst.msk [vmem:[#allocation2 + $0x1a0] sm:$0xff] %vm8, 0.0
  %63 = vst.msk [vmem:[#allocation2 + $0x1a8] sm:$0x3] %vm11, 0.0
  %v64 = vld [vmem:[%s0] sm:$0xff]
  %v65 = vld [vmem:[%s0 + $0x8] sm:$0xff]
  %v66 = vld [vmem:[%s0 + $0x10] sm:$0xff]
  %v67 = vld [vmem:[%s0 + $0x18] sm:$0xff]
  %v68 = vld [vmem:[%s0 + $0x20] sm:$0xff]
  %v69 = vld [vmem:[%s0 + $0x28] sm:$0xff]
  %v70 = vld [vmem:[%s0 + $0x30] sm:$0xff]
  %v71 = vld [vmem:[%s0 + $0x38] sm:$0xff]
  %v72 = vld [vmem:[%s0 + $0x40] sm:$0xff]
  %v73 = vld [vmem:[%s0 + $0x48] sm:$0xff]
  %v74 = vld [vmem:[%s0 + $0x50] sm:$0xff]
  %v75 = vld [vmem:[%s0 + $0x58] sm:$0xff]
  %v76 = vld [vmem:[%s0 + $0x60] sm:$0xff]
  %v77 = vld [vmem:[%s0 + $0x68] sm:$0xff]
  %v78 = vld [vmem:[%s0 + $0x70] sm:$0xff]
  %v79 = vld [vmem:[%s0 + $0x78] sm:$0xff]
  %v80 = vld [vmem:[%s0 + $0x80] sm:$0xff]
  %v81 = vld [vmem:[%s0 + $0x88] sm:$0xff]
  %v82 = vld [vmem:[%s0 + $0x90] sm:$0xff]
  %v83 = vld [vmem:[%s0 + $0x98] sm:$0xff]
  %v84 = vld [vmem:[%s0 + $0xa0] sm:$0xff]
  %v85 = vld [vmem:[%s0 + $0xa8] sm:$0xff]
  %v86 = vld [vmem:[%s0 + $0xb0] sm:$0xff]
  %v87 = vld [vmem:[%s0 + $0xb8] sm:$0xff]
  %v88 = vld [vmem:[%s0 + $0xc0] sm:$0xff]
  %v89 = vld [vmem:[%s0 + $0xc8] sm:$0xff]
  %v90 = vld [vmem:[%s0 + $0xd0] sm:$0xff]
  %v91 = vld [vmem:[%s0 + $0xd8] sm:$0xff]
  %v92 = vld [vmem:[%s0 + $0xe0] sm:$0xff]
  %v93 = vld [vmem:[%s0 + $0xe8] sm:$0xff]
  %v94 = vld [vmem:[%s0 + $0xf0] sm:$0xff]
  %v95 = vld [vmem:[%s0 + $0xf8] sm:$0xff]
  %s96 = scalar_lea.vmem [#allocation2], 24
  %97 = vst.msk [vmem:[%s96 + $0x1] sm:$0xff] %vm8, %v64
  %98 = vst.msk [vmem:[%s96 + $0x9] sm:$0xff] %vm8, %v65
  %99 = vst.msk [vmem:[%s96 + $0x19] sm:$0xff] %vm8, %v66
  %100 = vst.msk [vmem:[%s96 + $0x21] sm:$0xff] %vm8, %v67
  %101 = vst.msk [vmem:[%s96 + $0x31] sm:$0xff] %vm8, %v68
  %102 = vst.msk [vmem:[%s96 + $0x39] sm:$0xff] %vm8, %v69
  %103 = vst.msk [vmem:[%s96 + $0x49] sm:$0xff] %vm8, %v70
  %104 = vst.msk [vmem:[%s96 + $0x51] sm:$0xff] %vm8, %v71
  %105 = vst.msk [vmem:[%s96 + $0x61] sm:$0xff] %vm8, %v72
  %106 = vst.msk [vmem:[%s96 + $0x69] sm:$0xff] %vm8, %v73
  %107 = vst.msk [vmem:[%s96 + $0x79] sm:$0xff] %vm8, %v74
  %108 = vst.msk [vmem:[%s96 + $0x81] sm:$0xff] %vm8, %v75
  %109 = vst.msk [vmem:[%s96 + $0x91] sm:$0xff] %vm8, %v76
  %110 = vst.msk [vmem:[%s96 + $0x99] sm:$0xff] %vm8, %v77
  %111 = vst.msk [vmem:[%s96 + $0xa9] sm:$0xff] %vm8, %v78
  %112 = vst.msk [vmem:[%s96 + $0xb1] sm:$0xff] %vm8, %v79
  %113 = vst.msk [vmem:[%s96 + $0xc1] sm:$0xff] %vm8, %v80
  %114 = vst.msk [vmem:[%s96 + $0xc9] sm:$0xff] %vm8, %v81
  %115 = vst.msk [vmem:[%s96 + $0xd9] sm:$0xff] %vm8, %v82
  %116 = vst.msk [vmem:[%s96 + $0xe1] sm:$0xff] %vm8, %v83
  %117 = vst.msk [vmem:[%s96 + $0xf1] sm:$0xff] %vm8, %v84
  %118 = vst.msk [vmem:[%s96 + $0xf9] sm:$0xff] %vm8, %v85
  %119 = vst.msk [vmem:[%s96 + $0x109] sm:$0xff] %vm8, %v86
  %120 = vst.msk [vmem:[%s96 + $0x111] sm:$0xff] %vm8, %v87
  %121 = vst.msk [vmem:[%s96 + $0x121] sm:$0xff] %vm8, %v88
  %122 = vst.msk [vmem:[%s96 + $0x129] sm:$0xff] %vm8, %v89
  %123 = vst.msk [vmem:[%s96 + $0x139] sm:$0xff] %vm8, %v90
  %124 = vst.msk [vmem:[%s96 + $0x141] sm:$0xff] %vm8, %v91
  %125 = vst.msk [vmem:[%s96 + $0x151] sm:$0xff] %vm8, %v92
  %126 = vst.msk [vmem:[%s96 + $0x159] sm:$0xff] %vm8, %v93
  %127 = vst.msk [vmem:[%s96 + $0x169] sm:$0xff] %vm8, %v94
  %128 = vst.msk [vmem:[%s96 + $0x171] sm:$0xff] %vm8, %v95
  %v129 = vld [vmem:[#allocation2] sm:$0xff]
  %v130 = vld [vmem:[#allocation2 + $0x8] sm:$0xff]
  %v131 = vld [vmem:[#allocation2 + $0x10] sm:$0x3]
  %v132 = vld [vmem:[#allocation2 + $0x18] sm:$0xff]
  %v133 = vld [vmem:[#allocation2 + $0x20] sm:$0xff]
  %v134 = vld [vmem:[#allocation2 + $0x28] sm:$0x3]
  %v135 = vld [vmem:[#allocation2 + $0x30] sm:$0xff]
  %v136 = vld [vmem:[#allocation2 + $0x38] sm:$0xff]
  %v137 = vld [vmem:[#allocation2 + $0x40] sm:$0x3]
  %v138 = vld [vmem:[#allocation2 + $0x48] sm:$0xff]
  %v139 = vld [vmem:[#allocation2 + $0x50] sm:$0xff]
  %v140 = vld [vmem:[#allocation2 + $0x58] sm:$0x3]
  %v141 = vld [vmem:[#allocation2 + $0x60] sm:$0xff]
  %v142 = vld [vmem:[#allocation2 + $0x68] sm:$0xff]
  %v143 = vld [vmem:[#allocation2 + $0x70] sm:$0x3]
  %v144 = vld [vmem:[#allocation2 + $0x78] sm:$0xff]
  %v145 = vld [vmem:[#allocation2 + $0x80] sm:$0xff]
  %v146 = vld [vmem:[#allocation2 + $0x88] sm:$0x3]
  %v147 = vld [vmem:[#allocation2 + $0x90] sm:$0xff]
  %v148 = vld [vmem:[#allocation2 + $0x98] sm:$0xff]
  %v149 = vld [vmem:[#allocation2 + $0xa0] sm:$0x3]
  %v150 = vld [vmem:[#allocation2 + $0xa8] sm:$0xff]
  %v151 = vld [vmem:[#allocation2 + $0xb0] sm:$0xff]
  %v152 = vld [vmem:[#allocation2 + $0xb8] sm:$0x3]
  %v153 = vld [vmem:[#allocation2 + $0xc0] sm:$0xff]
  %v154 = vld [vmem:[#allocation2 + $0xc8] sm:$0xff]
  %v155 = vld [vmem:[#allocation2 + $0xd0] sm:$0x3]
  %v156 = vld [vmem:[#allocation2 + $0xd8] sm:$0xff]
  %v157 = vld [vmem:[#allocation2 + $0xe0] sm:$0xff]
  %v158 = vld [vmem:[#allocation2 + $0xe8] sm:$0x3]
  %v159 = vld [vmem:[#allocation2 + $0xf0] sm:$0xff]
  %v160 = vld [vmem:[#allocation2 + $0xf8] sm:$0xff]
  %v161 = vld [vmem:[#allocation2 + $0x100] sm:$0x3]
  %v162 = vld [vmem:[#allocation2 + $0x108] sm:$0xff]
  %v163 = vld [vmem:[#allocation2 + $0x110] sm:$0xff]
  %v164 = vld [vmem:[#allocation2 + $0x118] sm:$0x3]
  %v165 = vld [vmem:[#allocation2 + $0x120] sm:$0xff]
  %v166 = vld [vmem:[#allocation2 + $0x128] sm:$0xff]
  %v167 = vld [vmem:[#allocation2 + $0x130] sm:$0x3]
  %v168 = vld [vmem:[#allocation2 + $0x138] sm:$0xff]
  %v169 = vld [vmem:[#allocation2 + $0x140] sm:$0xff]
  %v170 = vld [vmem:[#allocation2 + $0x148] sm:$0x3]
  %v171 = vld [vmem:[#allocation2 + $0x150] sm:$0xff]
  %v172 = vld [vmem:[#allocation2 + $0x158] sm:$0xff]
  %v173 = vld [vmem:[#allocation2 + $0x160] sm:$0x3]
  %v174 = vld [vmem:[#allocation2 + $0x168] sm:$0xff]
  %v175 = vld [vmem:[#allocation2 + $0x170] sm:$0xff]
  %v176 = vld [vmem:[#allocation2 + $0x178] sm:$0x3]
  %v177 = vld [vmem:[%s96] sm:$0xff]
  %v178 = vld [vmem:[%s96 + $0x8] sm:$0xff]
  %v179 = vld [vmem:[%s96 + $0x10] sm:$0x3]
  %v180 = vld [vmem:[%s96 + $0x18] sm:$0xff]
  %v181 = vld [vmem:[%s96 + $0x20] sm:$0xff]
  %v182 = vld [vmem:[%s96 + $0x28] sm:$0x3]
  %v183 = vld [vmem:[%s96 + $0x30] sm:$0xff]
  %v184 = vld [vmem:[%s96 + $0x38] sm:$0xff]
  %v185 = vld [vmem:[%s96 + $0x40] sm:$0x3]
  %v186 = vld [vmem:[%s96 + $0x48] sm:$0xff]
  %v187 = vld [vmem:[%s96 + $0x50] sm:$0xff]
  %v188 = vld [vmem:[%s96 + $0x58] sm:$0x3]
  %v189 = vld [vmem:[%s96 + $0x60] sm:$0xff]
  %v190 = vld [vmem:[%s96 + $0x68] sm:$0xff]
  %v191 = vld [vmem:[%s96 + $0x70] sm:$0x3]
  %v192 = vld [vmem:[%s96 + $0x78] sm:$0xff]
  %v193 = vld [vmem:[%s96 + $0x80] sm:$0xff]
  %v194 = vld [vmem:[%s96 + $0x88] sm:$0x3]
  %v195 = vld [vmem:[%s96 + $0x90] sm:$0xff]
  %v196 = vld [vmem:[%s96 + $0x98] sm:$0xff]
  %v197 = vld [vmem:[%s96 + $0xa0] sm:$0x3]
  %v198 = vld [vmem:[%s96 + $0xa8] sm:$0xff]
  %v199 = vld [vmem:[%s96 + $0xb0] sm:$0xff]
  %v200 = vld [vmem:[%s96 + $0xb8] sm:$0x3]
  %v201 = vld [vmem:[%s96 + $0xc0] sm:$0xff]
  %v202 = vld [vmem:[%s96 + $0xc8] sm:$0xff]
  %v203 = vld [vmem:[%s96 + $0xd0] sm:$0x3]
  %v204 = vld [vmem:[%s96 + $0xd8] sm:$0xff]
  %v205 = vld [vmem:[%s96 + $0xe0] sm:$0xff]
  %v206 = vld [vmem:[%s96 + $0xe8] sm:$0x3]
  %v207 = vld [vmem:[%s96 + $0xf0] sm:$0xff]
  %v208 = vld [vmem:[%s96 + $0xf8] sm:$0xff]
  %v209 = vld [vmem:[%s96 + $0x100] sm:$0x3]
  %v210 = vld [vmem:[%s96 + $0x108] sm:$0xff]
  %v211 = vld [vmem:[%s96 + $0x110] sm:$0xff]
  %v212 = vld [vmem:[%s96 + $0x118] sm:$0x3]
  %v213 = vld [vmem:[%s96 + $0x120] sm:$0xff]
  %v214 = vld [vmem:[%s96 + $0x128] sm:$0xff]
  %v215 = vld [vmem:[%s96 + $0x130] sm:$0x3]
  %v216 = vld [vmem:[%s96 + $0x138] sm:$0xff]
  %v217 = vld [vmem:[%s96 + $0x140] sm:$0xff]
  %v218 = vld [vmem:[%s96 + $0x148] sm:$0x3]
  %v219 = vld [vmem:[%s96 + $0x150] sm:$0xff]
  %v220 = vld [vmem:[%s96 + $0x158] sm:$0xff]
  %v221 = vld [vmem:[%s96 + $0x160] sm:$0x3]
  %v222 = vld [vmem:[%s96 + $0x168] sm:$0xff]
  %v223 = vld [vmem:[%s96 + $0x170] sm:$0xff]
  %v224 = vld [vmem:[%s96 + $0x178] sm:$0x3]
  %v225 = vadd.f32 %v129, %v177
  %v226 = vadd.f32 %v130, %v178
  %v227 = vadd.f32 %v131, %v179
  %v228 = vadd.f32 %v132, %v180
  %v229 = vadd.f32 %v133, %v181
  %v230 = vadd.f32 %v134, %v182
  %v231 = vadd.f32 %v135, %v183
  %v232 = vadd.f32 %v136, %v184
  %v233 = vadd.f32 %v137, %v185
  %v234 = vadd.f32 %v138, %v186
  %v235 = vadd.f32 %v139, %v187
  %v236 = vadd.f32 %v140, %v188
  %v237 = vadd.f32 %v141, %v189
  %v238 = vadd.f32 %v142, %v190
  %v239 = vadd.f32 %v143, %v191
  %v240 = vadd.f32 %v144, %v192
  %v241 = vadd.f32 %v145, %v193
  %v242 = vadd.f32 %v146, %v194
  %v243 = vadd.f32 %v147, %v195
  %v244 = vadd.f32 %v148, %v196
  %v245 = vadd.f32 %v149, %v197
  %v246 = vadd.f32 %v150, %v198
  %v247 = vadd.f32 %v151, %v199
  %v248 = vadd.f32 %v152, %v200
  %v249 = vadd.f32 %v153, %v201
  %v250 = vadd.f32 %v154, %v202
  %v251 = vadd.f32 %v155, %v203
  %v252 = vadd.f32 %v156, %v204
  %v253 = vadd.f32 %v157, %v205
  %v254 = vadd.f32 %v158, %v206
  %v255 = vadd.f32 %v159, %v207
  %v256 = vadd.f32 %v160, %v208
  %v257 = vadd.f32 %v161, %v209
  %v258 = vadd.f32 %v162, %v210
  %v259 = vadd.f32 %v163, %v211
  %v260 = vadd.f32 %v164, %v212
  %v261 = vadd.f32 %v165, %v213
  %v262 = vadd.f32 %v166, %v214
  %v263 = vadd.f32 %v167, %v215
  %v264 = vadd.f32 %v168, %v216
  %v265 = vadd.f32 %v169, %v217
  %v266 = vadd.f32 %v170, %v218
  %v267 = vadd.f32 %v171, %v219
  %v268 = vadd.f32 %v172, %v220
  %v269 = vadd.f32 %v173, %v221
  %v270 = vadd.f32 %v174, %v222
  %v271 = vadd.f32 %v175, %v223
  %v272 = vadd.f32 %v176, %v224
  %s273 = scalar_lea.vmem [#allocation2], 48
  %v274 = vld [vmem:[%s273] sm:$0xff]
  %v275 = vld [vmem:[%s273 + $0x8] sm:$0xff]
  %v276 = vld [vmem:[%s273 + $0x10] sm:$0x3]
  %v277 = vld [vmem:[%s273 + $0x18] sm:$0xff]
  %v278 = vld [vmem:[%s273 + $0x20] sm:$0xff]
  %v279 = vld [vmem:[%s273 + $0x28] sm:$0x3]
  %v280 = vld [vmem:[%s273 + $0x30] sm:$0xff]
  %v281 = vld [vmem:[%s273 + $0x38] sm:$0xff]
  %v282 = vld [vmem:[%s273 + $0x40] sm:$0x3]
  %v283 = vld [vmem:[%s273 + $0x48] sm:$0xff]
  %v284 = vld [vmem:[%s273 + $0x50] sm:$0xff]
  %v285 = vld [vmem:[%s273 + $0x58] sm:$0x3]
  %v286 = vld [vmem:[%s273 + $0x60] sm:$0xff]
  %v287 = vld [vmem:[%s273 + $0x68] sm:$0xff]
  %v288 = vld [vmem:[%s273 + $0x70] sm:$0x3]
  %v289 = vld [vmem:[%s273 + $0x78] sm:$0xff]
  %v290 = vld [vmem:[%s273 + $0x80] sm:$0xff]
  %v291 = vld [vmem:[%s273 + $0x88] sm:$0x3]
  %v292 = vld [vmem:[%s273 + $0x90] sm:$0xff]
  %v293 = vld [vmem:[%s273 + $0x98] sm:$0xff]
  %v294 = vld [vmem:[%s273 + $0xa0] sm:$0x3]
  %v295 = vld [vmem:[%s273 + $0xa8] sm:$0xff]
  %v296 = vld [vmem:[%s273 + $0xb0] sm:$0xff]
  %v297 = vld [vmem:[%s273 + $0xb8] sm:$0x3]
  %v298 = vld [vmem:[%s273 + $0xc0] sm:$0xff]
  %v299 = vld [vmem:[%s273 + $0xc8] sm:$0xff]
  %v300 = vld [vmem:[%s273 + $0xd0] sm:$0x3]
  %v301 = vld [vmem:[%s273 + $0xd8] sm:$0xff]
  %v302 = vld [vmem:[%s273 + $0xe0] sm:$0xff]
  %v303 = vld [vmem:[%s273 + $0xe8] sm:$0x3]
  %v304 = vld [vmem:[%s273 + $0xf0] sm:$0xff]
  %v305 = vld [vmem:[%s273 + $0xf8] sm:$0xff]
  %v306 = vld [vmem:[%s273 + $0x100] sm:$0x3]
  %v307 = vld [vmem:[%s273 + $0x108] sm:$0xff]
  %v308 = vld [vmem:[%s273 + $0x110] sm:$0xff]
  %v309 = vld [vmem:[%s273 + $0x118] sm:$0x3]
  %v310 = vld [vmem:[%s273 + $0x120] sm:$0xff]
  %v311 = vld [vmem:[%s273 + $0x128] sm:$0xff]
  %v312 = vld [vmem:[%s273 + $0x130] sm:$0x3]
  %v313 = vld [vmem:[%s273 + $0x138] sm:$0xff]
  %v314 = vld [vmem:[%s273 + $0x140] sm:$0xff]
  %v315 = vld [vmem:[%s273 + $0x148] sm:$0x3]
  %v316 = vld [vmem:[%s273 + $0x150] sm:$0xff]
  %v317 = vld [vmem:[%s273 + $0x158] sm:$0xff]
  %v318 = vld [vmem:[%s273 + $0x160] sm:$0x3]
  %v319 = vld [vmem:[%s273 + $0x168] sm:$0xff]
  %v320 = vld [vmem:[%s273 + $0x170] sm:$0xff]
  %v321 = vld [vmem:[%s273 + $0x178] sm:$0x3]
  %v322 = vadd.f32 %v225, %v274
  %v323 = vadd.f32 %v226, %v275
  %v324 = vadd.f32 %v227, %v276
  %v325 = vadd.f32 %v228, %v277
  %v326 = vadd.f32 %v229, %v278
  %v327 = vadd.f32 %v230, %v279
  %v328 = vadd.f32 %v231, %v280
  %v329 = vadd.f32 %v232, %v281
  %v330 = vadd.f32 %v233, %v282
  %v331 = vadd.f32 %v234, %v283
  %v332 = vadd.f32 %v235, %v284
  %v333 = vadd.f32 %v236, %v285
  %v334 = vadd.f32 %v237, %v286
  %v335 = vadd.f32 %v238, %v287
  %v336 = vadd.f32 %v239, %v288
  %v337 = vadd.f32 %v240, %v289
  %v338 = vadd.f32 %v241, %v290
  %v339 = vadd.f32 %v242, %v291
  %v340 = vadd.f32 %v243, %v292
  %v341 = vadd.f32 %v244, %v293
  %v342 = vadd.f32 %v245, %v294
  %v343 = vadd.f32 %v246, %v295
  %v344 = vadd.f32 %v247, %v296
  %v345 = vadd.f32 %v248, %v297
  %v346 = vadd.f32 %v249, %v298
  %v347 = vadd.f32 %v250, %v299
  %v348 = vadd.f32 %v251, %v300
  %v349 = vadd.f32 %v252, %v301
  %v350 = vadd.f32 %v253, %v302
  %v351 = vadd.f32 %v254, %v303
  %v352 = vadd.f32 %v255, %v304
  %v353 = vadd.f32 %v256, %v305
  %v354 = vadd.f32 %v257, %v306
  %v355 = vadd.f32 %v258, %v307
  %v356 = vadd.f32 %v259, %v308
  %v357 = vadd.f32 %v260, %v309
  %v358 = vadd.f32 %v261, %v310
  %v359 = vadd.f32 %v262, %v311
  %v360 = vadd.f32 %v263, %v312
  %v361 = vadd.f32 %v264, %v313
  %v362 = vadd.f32 %v265, %v314
  %v363 = vadd.f32 %v266, %v315
  %v364 = vadd.f32 %v267, %v316
  %v365 = vadd.f32 %v268, %v317
  %v366 = vadd.f32 %v269, %v318
  %v367 = vadd.f32 %v270, %v319
  %v368 = vadd.f32 %v271, %v320
  %v369 = vadd.f32 %v272, %v321
  %vm418 = vcmask 1046528
  %v419 = vrot.slane %v322, 1
  %v420 = vrot.slane %v323, 1
  %v421 = vsel %vm418, %v419, %v420
  %v422 = vrot.slane %v324, 1
  %v423 = vsel %vm418, %v420, %v422
  %v424 = vrot.slane %v325, 1
  %v425 = vrot.slane %v326, 1
  %v426 = vsel %vm418, %v424, %v425
  %v427 = vrot.slane %v327, 1
  %v428 = vsel %vm418, %v425, %v427
  %v429 = vrot.slane %v328, 1
  %v430 = vrot.slane %v329, 1
  %v431 = vsel %vm418, %v429, %v430
  %v432 = vrot.slane %v330, 1
  %v433 = vsel %vm418, %v430, %v432
  %v434 = vrot.slane %v331, 1
  %v435 = vrot.slane %v332, 1
  %v436 = vsel %vm418, %v434, %v435
  %v437 = vrot.slane %v333, 1
  %v438 = vsel %vm418, %v435, %v437
  %v439 = vrot.slane %v334, 1
  %v440 = vrot.slane %v335, 1
  %v441 = vsel %vm418, %v439, %v440
  %v442 = vrot.slane %v336, 1
  %v443 = vsel %vm418, %v440, %v442
  %v444 = vrot.slane %v337, 1
  %v445 = vrot.slane %v338, 1
  %v446 = vsel %vm418, %v444, %v445
  %v447 = vrot.slane %v339, 1
  %v448 = vsel %vm418, %v445, %v447
  %v449 = vrot.slane %v340, 1
  %v450 = vrot.slane %v341, 1
  %v451 = vsel %vm418, %v449, %v450
  %v452 = vrot.slane %v342, 1
  %v453 = vsel %vm418, %v450, %v452
  %v454 = vrot.slane %v343, 1
  %v455 = vrot.slane %v344, 1
  %v456 = vsel %vm418, %v454, %v455
  %v457 = vrot.slane %v345, 1
  %v458 = vsel %vm418, %v455, %v457
  %v459 = vrot.slane %v346, 1
  %v460 = vrot.slane %v347, 1
  %v461 = vsel %vm418, %v459, %v460
  %v462 = vrot.slane %v348, 1
  %v463 = vsel %vm418, %v460, %v462
  %v464 = vrot.slane %v349, 1
  %v465 = vrot.slane %v350, 1
  %v466 = vsel %vm418, %v464, %v465
  %v467 = vrot.slane %v351, 1
  %v468 = vsel %vm418, %v465, %v467
  %v469 = vrot.slane %v352, 1
  %v470 = vrot.slane %v353, 1
  %v471 = vsel %vm418, %v469, %v470
  %v472 = vrot.slane %v354, 1
  %v473 = vsel %vm418, %v470, %v472
  %v474 = vrot.slane %v355, 1
  %v475 = vrot.slane %v356, 1
  %v476 = vsel %vm418, %v474, %v475
  %v477 = vrot.slane %v357, 1
  %v478 = vsel %vm418, %v475, %v477
  %v479 = vrot.slane %v358, 1
  %v480 = vrot.slane %v359, 1
  %v481 = vsel %vm418, %v479, %v480
  %v482 = vrot.slane %v360, 1
  %v483 = vsel %vm418, %v480, %v482
  %v484 = vrot.slane %v361, 1
  %v485 = vrot.slane %v362, 1
  %v486 = vsel %vm418, %v484, %v485
  %v487 = vrot.slane %v363, 1
  %v488 = vsel %vm418, %v485, %v487
  %v489 = vrot.slane %v364, 1
  %v490 = vrot.slane %v365, 1
  %v491 = vsel %vm418, %v489, %v490
  %v492 = vrot.slane %v366, 1
  %v493 = vsel %vm418, %v490, %v492
  %v494 = vrot.slane %v367, 1
  %v495 = vrot.slane %v368, 1
  %v496 = vsel %vm418, %v494, %v495
  %v497 = vrot.slane %v369, 1
  %v498 = vsel %vm418, %v495, %v497
  %v531 = vadd.f32 %v322, %v421
  %v532 = vadd.f32 %v323, %v423
  %v533 = vadd.f32 %v325, %v426
  %v534 = vadd.f32 %v326, %v428
  %v535 = vadd.f32 %v328, %v431
  %v536 = vadd.f32 %v329, %v433
  %v537 = vadd.f32 %v331, %v436
  %v538 = vadd.f32 %v332, %v438
  %v539 = vadd.f32 %v334, %v441
  %v540 = vadd.f32 %v335, %v443
  %v541 = vadd.f32 %v337, %v446
  %v542 = vadd.f32 %v338, %v448
  %v543 = vadd.f32 %v340, %v451
  %v544 = vadd.f32 %v341, %v453
  %v545 = vadd.f32 %v343, %v456
  %v546 = vadd.f32 %v344, %v458
  %v547 = vadd.f32 %v346, %v461
  %v548 = vadd.f32 %v347, %v463
  %v549 = vadd.f32 %v349, %v466
  %v550 = vadd.f32 %v350, %v468
  %v551 = vadd.f32 %v352, %v471
  %v552 = vadd.f32 %v353, %v473
  %v553 = vadd.f32 %v355, %v476
  %v554 = vadd.f32 %v356, %v478
  %v555 = vadd.f32 %v358, %v481
  %v556 = vadd.f32 %v359, %v483
  %v557 = vadd.f32 %v361, %v486
  %v558 = vadd.f32 %v362, %v488
  %v559 = vadd.f32 %v364, %v491
  %v560 = vadd.f32 %v365, %v493
  %v561 = vadd.f32 %v367, %v496
  %v562 = vadd.f32 %v368, %v498
  %vm563 = vcmask 1045504
  %v564 = vrot.slane %v322, 2
  %v565 = vrot.slane %v323, 2
  %v566 = vsel %vm563, %v564, %v565
  %v567 = vrot.slane %v324, 2
  %v568 = vsel %vm563, %v565, %v567
  %v569 = vrot.slane %v325, 2
  %v570 = vrot.slane %v326, 2
  %v571 = vsel %vm563, %v569, %v570
  %v572 = vrot.slane %v327, 2
  %v573 = vsel %vm563, %v570, %v572
  %v574 = vrot.slane %v328, 2
  %v575 = vrot.slane %v329, 2
  %v576 = vsel %vm563, %v574, %v575
  %v577 = vrot.slane %v330, 2
  %v578 = vsel %vm563, %v575, %v577
  %v579 = vrot.slane %v331, 2
  %v580 = vrot.slane %v332, 2
  %v581 = vsel %vm563, %v579, %v580
  %v582 = vrot.slane %v333, 2
  %v583 = vsel %vm563, %v580, %v582
  %v584 = vrot.slane %v334, 2
  %v585 = vrot.slane %v335, 2
  %v586 = vsel %vm563, %v584, %v585
  %v587 = vrot.slane %v336, 2
  %v588 = vsel %vm563, %v585, %v587
  %v589 = vrot.slane %v337, 2
  %v590 = vrot.slane %v338, 2
  %v591 = vsel %vm563, %v589, %v590
  %v592 = vrot.slane %v339, 2
  %v593 = vsel %vm563, %v590, %v592
  %v594 = vrot.slane %v340, 2
  %v595 = vrot.slane %v341, 2
  %v596 = vsel %vm563, %v594, %v595
  %v597 = vrot.slane %v342, 2
  %v598 = vsel %vm563, %v595, %v597
  %v599 = vrot.slane %v343, 2
  %v600 = vrot.slane %v344, 2
  %v601 = vsel %vm563, %v599, %v600
  %v602 = vrot.slane %v345, 2
  %v603 = vsel %vm563, %v600, %v602
  %v604 = vrot.slane %v346, 2
  %v605 = vrot.slane %v347, 2
  %v606 = vsel %vm563, %v604, %v605
  %v607 = vrot.slane %v348, 2
  %v608 = vsel %vm563, %v605, %v607
  %v609 = vrot.slane %v349, 2
  %v610 = vrot.slane %v350, 2
  %v611 = vsel %vm563, %v609, %v610
  %v612 = vrot.slane %v351, 2
  %v613 = vsel %vm563, %v610, %v612
  %v614 = vrot.slane %v352, 2
  %v615 = vrot.slane %v353, 2
  %v616 = vsel %vm563, %v614, %v615
  %v617 = vrot.slane %v354, 2
  %v618 = vsel %vm563, %v615, %v617
  %v619 = vrot.slane %v355, 2
  %v620 = vrot.slane %v356, 2
  %v621 = vsel %vm563, %v619, %v620
  %v622 = vrot.slane %v357, 2
  %v623 = vsel %vm563, %v620, %v622
  %v624 = vrot.slane %v358, 2
  %v625 = vrot.slane %v359, 2
  %v626 = vsel %vm563, %v624, %v625
  %v627 = vrot.slane %v360, 2
  %v628 = vsel %vm563, %v625, %v627
  %v629 = vrot.slane %v361, 2
  %v630 = vrot.slane %v362, 2
  %v631 = vsel %vm563, %v629, %v630
  %v632 = vrot.slane %v363, 2
  %v633 = vsel %vm563, %v630, %v632
  %v634 = vrot.slane %v364, 2
  %v635 = vrot.slane %v365, 2
  %v636 = vsel %vm563, %v634, %v635
  %v637 = vrot.slane %v366, 2
  %v638 = vsel %vm563, %v635, %v637
  %v639 = vrot.slane %v367, 2
  %v640 = vrot.slane %v368, 2
  %v641 = vsel %vm563, %v639, %v640
  %v642 = vrot.slane %v369, 2
  %v643 = vsel %vm563, %v640, %v642
  %v676 = vadd.f32 %v531, %v566
  %v677 = vadd.f32 %v532, %v568
  %v678 = vadd.f32 %v533, %v571
  %v679 = vadd.f32 %v534, %v573
  %v680 = vadd.f32 %v535, %v576
  %v681 = vadd.f32 %v536, %v578
  %v682 = vadd.f32 %v537, %v581
  %v683 = vadd.f32 %v538, %v583
  %v684 = vadd.f32 %v539, %v586
  %v685 = vadd.f32 %v540, %v588
  %v686 = vadd.f32 %v541, %v591
  %v687 = vadd.f32 %v542, %v593
  %v688 = vadd.f32 %v543, %v596
  %v689 = vadd.f32 %v544, %v598
  %v690 = vadd.f32 %v545, %v601
  %v691 = vadd.f32 %v546, %v603
  %v692 = vadd.f32 %v547, %v606
  %v693 = vadd.f32 %v548, %v608
  %v694 = vadd.f32 %v549, %v611
  %v695 = vadd.f32 %v550, %v613
  %v696 = vadd.f32 %v551, %v616
  %v697 = vadd.f32 %v552, %v618
  %v698 = vadd.f32 %v553, %v621
  %v699 = vadd.f32 %v554, %v623
  %v700 = vadd.f32 %v555, %v626
  %v701 = vadd.f32 %v556, %v628
  %v702 = vadd.f32 %v557, %v631
  %v703 = vadd.f32 %v558, %v633
  %v704 = vadd.f32 %v559, %v636
  %v705 = vadd.f32 %v560, %v638
  %v706 = vadd.f32 %v561, %v641
  %v707 = vadd.f32 %v562, %v643
  %708 = vst.msk [vmem:[%s1] sm:$0xff] %vm8, %v676
  %709 = vst.msk [vmem:[%s1 + $0x8] sm:$0xff] %vm8, %v677
  %710 = vst.msk [vmem:[%s1 + $0x10] sm:$0xff] %vm8, %v678
  %711 = vst.msk [vmem:[%s1 + $0x18] sm:$0xff] %vm8, %v679
  %712 = vst.msk [vmem:[%s1 + $0x20] sm:$0xff] %vm8, %v680
  %713 = vst.msk [vmem:[%s1 + $0x28] sm:$0xff] %vm8, %v681
  %714 = vst.msk [vmem:[%s1 + $0x30] sm:$0xff] %vm8, %v682
  %715 = vst.msk [vmem:[%s1 + $0x38] sm:$0xff] %vm8, %v683
  %716 = vst.msk [vmem:[%s1 + $0x40] sm:$0xff] %vm8, %v684
  %717 = vst.msk [vmem:[%s1 + $0x48] sm:$0xff] %vm8, %v685
  %718 = vst.msk [vmem:[%s1 + $0x50] sm:$0xff] %vm8, %v686
  %719 = vst.msk [vmem:[%s1 + $0x58] sm:$0xff] %vm8, %v687
  %720 = vst.msk [vmem:[%s1 + $0x60] sm:$0xff] %vm8, %v688
  %721 = vst.msk [vmem:[%s1 + $0x68] sm:$0xff] %vm8, %v689
  %722 = vst.msk [vmem:[%s1 + $0x70] sm:$0xff] %vm8, %v690
  %723 = vst.msk [vmem:[%s1 + $0x78] sm:$0xff] %vm8, %v691
  %724 = vst.msk [vmem:[%s1 + $0x80] sm:$0xff] %vm8, %v692
  %725 = vst.msk [vmem:[%s1 + $0x88] sm:$0xff] %vm8, %v693
  %726 = vst.msk [vmem:[%s1 + $0x90] sm:$0xff] %vm8, %v694
  %727 = vst.msk [vmem:[%s1 + $0x98] sm:$0xff] %vm8, %v695
  %728 = vst.msk [vmem:[%s1 + $0xa0] sm:$0xff] %vm8, %v696
  %729 = vst.msk [vmem:[%s1 + $0xa8] sm:$0xff] %vm8, %v697
  %730 = vst.msk [vmem:[%s1 + $0xb0] sm:$0xff] %vm8, %v698
  %731 = vst.msk [vmem:[%s1 + $0xb8] sm:$0xff] %vm8, %v699
  %732 = vst.msk [vmem:[%s1 + $0xc0] sm:$0xff] %vm8, %v700
  %733 = vst.msk [vmem:[%s1 + $0xc8] sm:$0xff] %vm8, %v701
  %734 = vst.msk [vmem:[%s1 + $0xd0] sm:$0xff] %vm8, %v702
  %735 = vst.msk [vmem:[%s1 + $0xd8] sm:$0xff] %vm8, %v703
  %736 = vst.msk [vmem:[%s1 + $0xe0] sm:$0xff] %vm8, %v704
  %737 = vst.msk [vmem:[%s1 + $0xe8] sm:$0xff] %vm8, %v705
  %738 = vst.msk [vmem:[%s1 + $0xf0] sm:$0xff] %vm8, %v706
  %739 = vst.msk [vmem:[%s1 + $0xf8] sm:$0xff] %vm8, %v707
  // Predicated region
  $region6: #{tpu_custom_call.1} parent=0 // pred_check
    _
  $region7: #{tpu_custom_call.1} parent=0 // pred_check_branch
    %741 = sbr.rel (0) target = $region9
  $region8: #{tpu_custom_call.1} parent=0 // pred_region
    _
  $region9: #{tpu_custom_call.1} parent=0 // pred_fallthru
    _
  // Predicated region
  $region10: #{tpu_custom_call.1} parent=0 // pred_check
    _
  $region11: #{tpu_custom_call.1} parent=0 // pred_check_branch
    %743 = sbr.rel (0) target = $region13
  $region12: #{tpu_custom_call.1} parent=0 // pred_region
    _
  $region13: #{tpu_custom_call.1} parent=0 // pred_fallthru
    _

</llo_original>
